<compile_context>
chip_gen: v7x
topology: tpu7x:2x2x1
jax: 0.10.0
libtpu: 0.0.40
codegen_flags: <defaults>
</compile_context>

<pallas_src>
import functools

import jax
import jax.numpy as jnp
from jax.experimental import pallas as pl
from jax.experimental.pallas import tpu as pltpu

LANE = 128  # lane-dense width for packed weights / hidden state / output slab


def _ac_fused_kernel(x_ref, w0_ref, b0_ref, wr_ref, out_ref, *,
                     num_actions, num_rest):
    """Fused A2C forward.

    x_ref : (B, d_in) f32      raw input (no wrapper augmentation)
    w0_ref: (d_in, 128) f32    layer-0 packed weight  [critic | actor | 0]
    b0_ref: (1, 128)  f32      layer-0 packed bias row (+1.0 at the const column)
    wr_ref: (L-1, 128, 128) bf16  layers 1..L-1, block-diagonal, bias rows folded,
                                  constant-1 column carried through the ReLUs
    out_ref: (B, 128) f32      lane 0 = value, lanes 1..A = softmax probs, rest 0
    """
    # Layer 0: explicit matmul + bias-row add (bias row also seeds the const-1 carry).
    h = jnp.dot(x_ref[...], w0_ref[...], preferred_element_type=jnp.float32)
    h = jnp.maximum(h + b0_ref[...], 0.0)                      # (B, 128) f32

    # Hidden layers: block-diagonal critic|actor, biases folded via const column.
    for li in range(num_rest - 1):
        h = jnp.maximum(
            jnp.dot(h.astype(jnp.bfloat16), wr_ref[li],
                    preferred_element_type=jnp.float32), 0.0)

    # Final layer: lane 0 = critic value, lanes 1..A = actor logits, rest = 0.
    out = jnp.dot(h.astype(jnp.bfloat16), wr_ref[num_rest - 1],
                  preferred_element_type=jnp.float32)

    lane = jax.lax.broadcasted_iota(jnp.int32, out.shape, 1)
    amask = jnp.logical_and(lane >= 1, lane <= num_actions)

    # Masked, max-stabilized softmax over the real action lanes only (f32 epilogue).
    logits = jnp.where(amask, out, -1e30)
    m = jnp.max(logits, axis=1, keepdims=True)
    e = jnp.exp(logits - m)                 # padded lanes underflow to exactly 0
    denom = jnp.sum(e, axis=1, keepdims=True)
    probs = e / denom                       # exact: rows sum to 1 to f32 precision

    # Lane-dense packed store: value in lane 0, probs in lanes 1..A, zeros elsewhere.
    out_ref[...] = jnp.where(lane == 0, out, probs)


def pack_ac_weights(critic_params, actor_params, d_in, num_actions,
                    lane=LANE, rest_dtype=jnp.bfloat16):
    """Pack both heads into (w0, b0, wrest).

    Layer 0 : w0 (d_in, lane) f32  cols [0,hc0)=critic W0, [hc0,hc0+ha0)=actor W0
              b0 (1, lane)   f32  packed biases, 1.0 at col hc0+ha0 (const carry)
    Layers 1..L-1 : wrest (L-1, lane, lane) bf16 block-diagonal, bias rows at the
              incoming const column, const carried to col (hc_i + ha_i) each layer.
    Final layer output: value at col 0, action logits at cols [1, 1+num_actions).
    """
    L = len(critic_params)
    assert len(actor_params) == L and L >= 2, "fused packing needs equal-depth heads"

    wc0, bc0 = critic_params[0]
    wa0, ba0 = actor_params[0]
    hc0, ha0 = wc0.shape[1], wa0.shape[1]
    assert d_in <= lane and hc0 + ha0 + 1 <= lane, "widths must fit one 128-lane block"

    w0 = jnp.zeros((d_in, lane), jnp.float32)
    w0 = w0.at[:, :hc0].set(wc0)
    w0 = w0.at[:, hc0:hc0 + ha0].set(wa0)
    b0 = jnp.zeros((1, lane), jnp.float32)
    b0 = b0.at[0, :hc0].set(bc0.reshape(-1))
    b0 = b0.at[0, hc0:hc0 + ha0].set(ba0.reshape(-1))
    b0 = b0.at[0, hc0 + ha0].set(1.0)            # constant-1 carry (ReLU(1)=1)

    mats = []
    c_off, a_off, const_col = 0, hc0, hc0 + ha0
    for li in range(1, L):
        wc, bc = critic_params[li]
        wa, ba = actor_params[li]
        kc, nc = wc.shape
        ka, na = wa.shape
        w = jnp.zeros((lane, lane), jnp.float32)
        if li < L - 1:
            oc, oa, oconst = 0, nc, nc + na
            assert oconst + 1 <= lane, "hidden widths must fit in one 128-lane block"
            w = w.at[c_off:c_off + kc, oc:oc + nc].set(wc)
            w = w.at[a_off:a_off + ka, oa:oa + na].set(wa)
            w = w.at[const_col, oc:oc + nc].set(bc.reshape(-1))
            w = w.at[const_col, oa:oa + na].set(ba.reshape(-1))
            w = w.at[const_col, oconst].set(1.0)
            c_off, a_off, const_col = oc, oa, oconst
        else:
            assert nc == 1 and na == num_actions and 1 + num_actions <= lane
            w = w.at[c_off:c_off + kc, 0:1].set(wc)
            w = w.at[a_off:a_off + ka, 1:1 + na].set(wa)
            w = w.at[const_col, 0:1].set(bc.reshape(-1))
            w = w.at[const_col, 1:1 + na].set(ba.reshape(-1))
        mats.append(w)
    wrest = jnp.stack(mats, axis=0).astype(rest_dtype)   # (L-1, lane, lane)
    return w0, b0, wrest


@functools.partial(jax.jit, static_argnames=("num_actions",))
def ac_linear_forward(x, w0, b0, wrest, *, num_actions):
    """Full A2C forward in a single Pallas invocation. Returns (probs, value)."""
    B = x.shape[0]
    num_rest = wrest.shape[0]

    vmem = pl.BlockSpec(memory_space=pltpu.MemorySpace.VMEM)
    slab = pl.pallas_call(
        functools.partial(_ac_fused_kernel,
                          num_actions=num_actions, num_rest=num_rest),
        out_shape=jax.ShapeDtypeStruct((B, LANE), jnp.float32),
        in_specs=[vmem, vmem, vmem, vmem],   # 4 small input DMAs, zero wrapper prep
        out_specs=vmem,                      # single lane-dense output slab -> 1 DMA
    )(x, w0, b0, wrest)

    # Sliced inside the same jit at the point of use (no extra dispatches).
    value = slab[:, 0:1]
    probs = slab[:, 1:1 + num_actions]
    return probs, value


def init_mlp_params(key, dims):
    """dims = [d0, ..., dL]; returns list of (W (d_i, d_{i+1}), b (1, d_{i+1}))."""
    params = []
    for din, dout in zip(dims[:-1], dims[1:]):
        key, sub = jax.random.split(key)
        w = 0.1 * jax.random.normal(sub, (din, dout), dtype=jnp.float32)
        b = jnp.full((1, dout), 0.1, dtype=jnp.float32)
        params.append((w, b))
    return params, key


def _ref_forward(x, critic_params, actor_params):
    """Pure-JAX reference of the PyTorch module forward (discrete, relu)."""
    def mlp(h, params):
        for i, (w, b) in enumerate(params):
            h = h @ w + b
            if i < len(params) - 1:
                h = jnp.maximum(h, 0.0)
        return h
    value = mlp(x, critic_params)
    mu = mlp(x, actor_params)
    probs = jax.nn.softmax(mu, axis=1)
    return probs, value


if __name__ == "__main__":
    # Small shapes consistent with the module.
    input_shape = 16
    num_actions = 4
    hidden_actor = [32, 32]
    hidden_critic = [32, 32]
    batch = 8
    d_in = input_shape + num_actions  # first Linear in_features

    key = jax.random.PRNGKey(0)
    key, kx = jax.random.split(key)
    x = jax.random.normal(kx, (batch, d_in), dtype=jnp.float32)

    critic_dims = [d_in] + hidden_critic + [1]
    actor_dims = [d_in] + hidden_actor + [num_actions]
    critic_params, key = init_mlp_params(key, critic_dims)
    actor_params, key = init_mlp_params(key, actor_dims)

    # One-time prepack: layer-0 (f32 w + bias row) and bf16 block-diagonal rest.
    w0, b0, wrest = pack_ac_weights(critic_params, actor_params, d_in, num_actions)

    probs, value = ac_linear_forward(x, w0, b0, wrest, num_actions=num_actions)
    jax.block_until_ready((probs, value))

    # Sanity: shapes, softmax rows sum to 1, and agreement with the pure-JAX
    # reference (loose tol: bf16 packed weights + default MXU precision).
    assert probs.shape == (batch, num_actions)
    assert value.shape == (batch, 1)
    assert bool(jnp.all(probs >= 0.0))
    assert bool(jnp.allclose(jnp.sum(probs, axis=1), 1.0, atol=1e-3))
    probs_ref, value_ref = _ref_forward(x, critic_params, actor_params)
    assert bool(jnp.allclose(probs, probs_ref, rtol=5e-2, atol=5e-2))
    assert bool(jnp.allclose(value, value_ref, rtol=5e-2, atol=5e-2))

    print("KERNEL_OK")
</pallas_src>

<mosaic_0001>
module attributes {stable_mosaic.version = 11 : i64} {
  func.func @_ac_fused_kernel(%arg0: memref<8x20xf32, #tpu.memory_space<vmem>>, %arg1: memref<20x128xf32, #tpu.memory_space<vmem>>, %arg2: memref<1x128xf32, #tpu.memory_space<vmem>>, %arg3: memref<2x128x128xbf16, #tpu.memory_space<vmem>>, %arg4: memref<8x128xf32, #tpu.memory_space<vmem>>) attributes {dimension_semantics = [], scalar_prefetch = 0 : i64, scratch_operands = 0 : i64, tpu.core_type = #tpu.core_type<tc>} {
    %c0 = arith.constant 0 : index
    %c0_0 = arith.constant 0 : index
    %0 = vector.load %arg0[%c0, %c0_0] : memref<8x20xf32, #tpu.memory_space<vmem>>, vector<8x20xf32>
    %c0_1 = arith.constant 0 : index
    %c0_2 = arith.constant 0 : index
    %1 = vector.load %arg1[%c0_1, %c0_2] : memref<20x128xf32, #tpu.memory_space<vmem>>, vector<20x128xf32>
    %cst = arith.constant dense<0.000000e+00> : vector<8x128xf32>
    %2 = tpu.matmul %0, %1, %cst {dimension_numbers = #tpu.dot_dimension_numbers<[1], [0], [0], [1], [0, 0, 1, 1], [], []>} : vector<8x20xf32>, vector<20x128xf32>, vector<8x128xf32> -> vector<8x128xf32>
    %c0_3 = arith.constant 0 : index
    %c0_4 = arith.constant 0 : index
    %3 = vector.load %arg2[%c0_3, %c0_4] : memref<1x128xf32, #tpu.memory_space<vmem>>, vector<1x128xf32>
    %4 = vector.broadcast %3 : vector<1x128xf32> to vector<8x128xf32>
    %5 = arith.addf %2, %4 : vector<8x128xf32>
    %cst_5 = arith.constant 0.000000e+00 : f32
    %6 = vector.broadcast %cst_5 : f32 to vector<8x128xf32>
    %7 = arith.maximumf %5, %6 : vector<8x128xf32>
    %8 = arith.truncf %7 : vector<8x128xf32> to vector<8x128xbf16>
    %c0_6 = arith.constant 0 : index
    %c0_7 = arith.constant 0 : index
    %c0_8 = arith.constant 0 : index
    %9 = vector.load %arg3[%c0_6, %c0_7, %c0_8] : memref<2x128x128xbf16, #tpu.memory_space<vmem>>, vector<1x128x128xbf16>
    %10 = vector.shape_cast %9 : vector<1x128x128xbf16> to vector<128x128xbf16>
    %cst_9 = arith.constant dense<0.000000e+00> : vector<8x128xf32>
    %11 = tpu.matmul %8, %10, %cst_9 {dimension_numbers = #tpu.dot_dimension_numbers<[1], [0], [0], [1], [0, 0, 1, 1], [], []>} : vector<8x128xbf16>, vector<128x128xbf16>, vector<8x128xf32> -> vector<8x128xf32>
    %cst_10 = arith.constant 0.000000e+00 : f32
    %12 = vector.broadcast %cst_10 : f32 to vector<8x128xf32>
    %13 = arith.maximumf %11, %12 : vector<8x128xf32>
    %14 = arith.truncf %13 : vector<8x128xf32> to vector<8x128xbf16>
    %c1 = arith.constant 1 : index
    %c0_11 = arith.constant 0 : index
    %c0_12 = arith.constant 0 : index
    %15 = vector.load %arg3[%c1, %c0_11, %c0_12] : memref<2x128x128xbf16, #tpu.memory_space<vmem>>, vector<1x128x128xbf16>
    %16 = vector.shape_cast %15 : vector<1x128x128xbf16> to vector<128x128xbf16>
    %cst_13 = arith.constant dense<0.000000e+00> : vector<8x128xf32>
    %17 = tpu.matmul %14, %16, %cst_13 {dimension_numbers = #tpu.dot_dimension_numbers<[1], [0], [0], [1], [0, 0, 1, 1], [], []>} : vector<8x128xbf16>, vector<128x128xbf16>, vector<8x128xf32> -> vector<8x128xf32>
    %18 = tpu.iota {dimensions = array<i32: 1>} : vector<8x128xi32>
    %c1_i32 = arith.constant 1 : i32
    %19 = vector.broadcast %c1_i32 : i32 to vector<8x128xi32>
    %20 = arith.cmpi sge, %18, %19 : vector<8x128xi32>
    %c4_i32 = arith.constant 4 : i32
    %21 = vector.broadcast %c4_i32 : i32 to vector<8x128xi32>
    %22 = arith.cmpi sle, %18, %21 : vector<8x128xi32>
    %23 = arith.andi %20, %22 : vector<8x128xi1>
    %cst_14 = arith.constant -1.000000e+30 : f32
    %24 = vector.broadcast %cst_14 : f32 to vector<8x128xf32>
    %25 = arith.select %23, %17, %24 : vector<8x128xi1>, vector<8x128xf32>
    %cst_15 = arith.constant dense<0xFF800000> : vector<8xf32>
    %26 = vector.multi_reduction <maximumf>, %25, %cst_15 [1] : vector<8x128xf32> to vector<8xf32>
    %27 = vector.shape_cast %26 : vector<8xf32> to vector<8x1xf32>
    %28 = vector.broadcast %27 : vector<8x1xf32> to vector<8x128xf32>
    %29 = arith.subf %25, %28 : vector<8x128xf32>
    %30 = math.exp %29 : vector<8x128xf32>
    %cst_16 = arith.constant dense<0.000000e+00> : vector<8xf32>
    %31 = vector.multi_reduction <add>, %30, %cst_16 [1] : vector<8x128xf32> to vector<8xf32>
    %32 = vector.shape_cast %31 : vector<8xf32> to vector<8x1xf32>
    %33 = vector.broadcast %32 : vector<8x1xf32> to vector<8x128xf32>
    %34 = arith.divf %30, %33 : vector<8x128xf32>
    %c0_i32 = arith.constant 0 : i32
    %35 = vector.broadcast %c0_i32 : i32 to vector<8x128xi32>
    %36 = arith.cmpi eq, %18, %35 : vector<8x128xi32>
    %37 = arith.select %36, %17, %34 : vector<8x128xi1>, vector<8x128xf32>
    %c0_17 = arith.constant 0 : index
    %c0_18 = arith.constant 0 : index
    %38 = vector.load %arg4[%c0_17, %c0_18] : memref<8x128xf32, #tpu.memory_space<vmem>>, vector<8x128xf32>
    tpu.vector_store %arg4[%c0_17, %c0_18], %37 {strides = array<i32>} : memref<8x128xf32, #tpu.memory_space<vmem>>, vector<8x128xf32>,
    return
  }
}

</mosaic_0001>

<llo_original>
// kernel: ac_linear_forward.1
$region0: #{ac_linear_forward.1}
  #allocation0 [shape = 'u32[]', space=smem, size = 0x4, offset = 0x4, fixed_abs, tag = 'smem constant byte address 0x4 - core index']
  #allocation1 [shape = 'u32[144,128]{1,0:T(1,128)}', space=vmem, size = 0x12000, scoped, tag = 'internal scratch']
  %s0 = inlined_call_operand.hbm [shape: f32[8,20], index: 0, kind: input, shape index: {}]
  %s1 = inlined_call_operand.hbm [shape: f32[20,128], index: 1, kind: input, shape index: {}]
  %s2 = inlined_call_operand.vmem [shape: f32[1,128], index: 2, kind: input, shape index: {}]
  %s3 = inlined_call_operand.hbm [shape: bf16[2,128,128], index: 3, kind: input, shape index: {}]
  %s4 = inlined_call_operand.vmem [shape: f32[8,128], index: 4, kind: output, shape index: {}]
  %s5 = sld [smem:[#allocation0]]
  $region38: #{ac_linear_forward.1} parent=0
    _
  %s7 = ssub.s32 1, %s5
  %s8 = scalar_select 0, %s7, %s5
  $region1: #{ac_linear_forward.1} parent=0
    #allocation2 [shape = 'u8[4096]{0}', space=vmem, size = 0x1000, scoped, tag = 'input window, operand 0, single buffered']
    #allocation3 [shape = 's32[1]{0}', space=sflag, size = 0x4, scoped, tag = 'scoped memory for ac_linear_forward.1']
    #allocation4 [shape = 'u8[12288]{0}', space=vmem, size = 0x3000, scoped, tag = 'input window, operand 1, single buffered']
    #allocation5 [shape = 's32[1]{0}', space=sflag, size = 0x4, scoped, tag = 'scoped memory for ac_linear_forward.1']
    #allocation6 [shape = 'u8[65536]{0}', space=vmem, size = 0x10000, scoped, tag = 'input window, operand 3, single buffered']
    %9 = vsyncpa [#allocation3], 0
    %10 = vsyncpa [#allocation5], 0
    // Predicated region
    $region2: #{ac_linear_forward.1} parent=1 // pred_check
      _
    $region3: #{ac_linear_forward.1} parent=1 // pred_check_branch
      %12 = sbr.rel (0) target = $region5
    $region4: #{ac_linear_forward.1} parent=1 // pred_region
      %s14 = ssub.s32 128, 128
      %15 = vsyncadd [#allocation3], %s14
      %s17 = sshll.u32 [#allocation2], 4
      %s18 = int_to_ptr.vmem [resolvable:$true] %s17
      %20 = dma.hbm_to_vmem [thread:$0]  %s0, 128, %s18, [#allocation3]
    $region5: #{ac_linear_forward.1} parent=1 // pred_fallthru
      _
    // Predicated region
    $region6: #{ac_linear_forward.1} parent=1 // pred_check
      _
    $region7: #{ac_linear_forward.1} parent=1 // pred_check_branch
      %22 = sbr.rel (0) target = $region9
    $region8: #{ac_linear_forward.1} parent=1 // pred_region
      %s24 = ssub.s32 384, 384
      %25 = vsyncadd [#allocation5], %s24
      %s26 = sshll.u32 [#allocation4], 4
      %s27 = int_to_ptr.vmem [resolvable:$true] %s26
      %32 = dma.hbm_to_vmem [thread:$0]  %s1, 384, %s27, [#allocation5], 128, 128, 8
    $region9: #{ac_linear_forward.1} parent=1 // pred_fallthru
      _
    // Predicated region
    $region10: #{ac_linear_forward.1} parent=1 // pred_check
      _
    $region11: #{ac_linear_forward.1} parent=1 // pred_check_branch
      %34 = sbr.rel (0) target = $region13
    $region12: #{ac_linear_forward.1} parent=1 // pred_region
      _
    $region13: #{ac_linear_forward.1} parent=1 // pred_fallthru
      _
    // Predicated region
    $region14: #{ac_linear_forward.1} parent=1 // pred_check
      _
    $region15: #{ac_linear_forward.1} parent=1 // pred_check_branch
      %36 = sbr.rel (0) target = $region17
    $region16: #{ac_linear_forward.1} parent=1 // pred_region
      %s38 = ssub.s32 2048, 2048
      %39 = vsyncadd [#allocation5], %s38
      %s40 = sshll.u32 [#allocation6], 4
      %s41 = int_to_ptr.vmem [resolvable:$true] %s40
      %46 = dma.hbm_to_vmem [thread:$0]  %s3, 2048, %s41, [#allocation5], 64, 64, 4
    $region17: #{ac_linear_forward.1} parent=1 // pred_fallthru
      _
    // Predicated region
    $region18: #{ac_linear_forward.1} parent=1 // pred_check
      _
    $region19: #{ac_linear_forward.1} parent=1 // pred_check_branch
      %48 = sbr.rel (0) target = $region21
    $region20: #{ac_linear_forward.1} parent=1 // pred_region
      %49 = dma.done [#allocation3], 128
    $region21: #{ac_linear_forward.1} parent=1 // pred_fallthru
      _
    // Predicated region
    $region22: #{ac_linear_forward.1} parent=1 // pred_check
      _
    $region23: #{ac_linear_forward.1} parent=1 // pred_check_branch
      %51 = sbr.rel (0) target = $region25
    $region24: #{ac_linear_forward.1} parent=1 // pred_region
      %52 = dma.done [#allocation5], 384
    $region25: #{ac_linear_forward.1} parent=1 // pred_fallthru
      _
    // Predicated region
    $region26: #{ac_linear_forward.1} parent=1 // pred_check
      _
    $region27: #{ac_linear_forward.1} parent=1 // pred_check_branch
      %54 = sbr.rel (0) target = $region29
    $region28: #{ac_linear_forward.1} parent=1 // pred_region
      %55 = dma.done [#allocation5], 2048
    $region29: #{ac_linear_forward.1} parent=1 // pred_fallthru
      _
    %v57 = vld [vmem:[#allocation2] sm:$0xff]
    %v58 = vld [vmem:[#allocation4] sm:$0xff]
    %v59 = vld [vmem:[#allocation4 + $0x8] sm:$0xff]
    %v60 = vld [vmem:[#allocation4 + $0x10] sm:$0xf]
    %v61 = vld [vmem:[%s2] sm:$0x1]
    %v63 = vlaneseq
    %v64 = vshrl.u32 %v63, 7
    %v65 = vsub.s32 0, %v64
    %v66 = vrot.slane %v61, %v65
    %vm68 = vcmask 162816
    %v70 = vsel %vm68, %v57, 0
    %vm72 = vcmask 1043456
    %v74 = vsel %vm72, %v60, 0
    %76 = vmatprep.subr.mxu0 0.0
    %77 = vmatpush1.msra.mxu0 %v58
    %78 = vmatprep.subr.mxu0 0.0
    %79 = vmatpush1.msra.mxu0 %v59
    %80 = vmatprep.subr.mxu0 0.0
    %81 = vmatpush1.msra.mxu0 %v74
    %82 = vmatprep.subr.mxu0 0.0
    %83 = vmatpush1.msra.mxu0 0.0
    %84 = vmatprep.subr.mxu0 0.0
    %85 = vmatpush1.msra.mxu0 0.0
    %86 = vmatprep.subr.mxu0 0.0
    %87 = vmatpush1.msra.mxu0 0.0
    %88 = vmatprep.subr.mxu0 0.0
    %89 = vmatpush1.msra.mxu0 0.0
    %90 = vmatprep.subr.mxu0 0.0
    %91 = vmatpush1.msra.mxu0 0.0
    %92 = vmatprep.subr.mxu0 0.0
    %93 = vmatpush1.msra.mxu0 0.0
    %94 = vmatprep.subr.mxu0 0.0
    %95 = vmatpush1.msra.mxu0 0.0
    %96 = vmatprep.subr.mxu0 0.0
    %97 = vmatpush1.msra.mxu0 0.0
    %98 = vmatprep.subr.mxu0 0.0
    %99 = vmatpush1.msra.mxu0 0.0
    %100 = vmatprep.subr.mxu0 0.0
    %101 = vmatpush1.msra.mxu0 0.0
    %102 = vmatprep.subr.mxu0 0.0
    %103 = vmatpush1.msra.mxu0 0.0
    %104 = vmatprep.subr.mxu0 0.0
    %105 = vmatpush1.msra.mxu0 0.0
    %106 = vmatprep.subr.mxu0 0.0
    %107 = vmatpush1.msra.mxu0 0.0
    %108 = vmatprep.subr.mxu0 0.0
    %109 = vmatpush1.msra.mxu0 0.0
    %110 = vmatprep.subr.mxu0 0.0
    %111 = vmatpush1.msra.mxu0 0.0
    %112 = vmatprep.subr.mxu0 0.0
    %113 = vmatpush1.msra.mxu0 0.0
    %114 = vmatprep.subr.mxu0 0.0
    %115 = vmatpush1.msra.mxu0 0.0
    %116 = vmatprep.subr.mxu0 0.0
    %117 = vmatpush1.msra.mxu0 0.0
    %118 = vmatprep.subr.mxu0 0.0
    %119 = vmatpush1.msra.mxu0 0.0
    %120 = vmatprep.subr.mxu0 0.0
    %121 = vmatpush1.msra.mxu0 0.0
    %122 = vmatprep.subr.mxu0 0.0
    %123 = vmatpush1.msra.mxu0 0.0
    %124 = vmatprep.subr.mxu0 0.0
    %125 = vmatpush1.msra.mxu0 0.0
    %126 = vmatprep.subr.mxu0 0.0
    %127 = vmatpush1.msra.mxu0 0.0
    %128 = vmatprep.subr.mxu0 0.0
    %129 = vmatpush1.msra.mxu0 0.0
    %130 = vmatprep.subr.mxu0 0.0
    %131 = vmatpush1.msra.mxu0 0.0
    %132 = vmatprep.subr.mxu0 0.0
    %133 = vmatpush1.msra.mxu0 0.0
    %134 = vmatprep.subr.mxu0 0.0
    %135 = vmatpush1.msra.mxu0 0.0
    %136 = vmatprep.subr.mxu0 0.0
    %137 = vmatpush1.msra.mxu0 0.0
    %138 = vmatprep.subr.mxu0 0.0
    %139 = vmatpush1.msra.mxu0 0.0
    %140 = vmatprep.mubr.f32.mxu0 0.0
    %141 = vmatmul.mubr.f32.gmra.mrb[0].mxu0 %v70
    %v142 = vpop.f32.mrb[0].mxu0
    %v143 = vadd.f32 %v66, %v142
    %v144 = vpop.f32.mrb[0].mxu0
    %145 = vdwg.mxu0
    %v146 = vmax.f32 %v143, 0.0
    %v147 = vpack.c.bf16 %v146, %v146
    %v148 = vld [vmem:[#allocation6] sm:$0xf]
    %v149 = vld [vmem:[#allocation6 + $0x4] sm:$0xf]
    %v150 = vld [vmem:[#allocation6 + $0x8] sm:$0xf]
    %v151 = vld [vmem:[#allocation6 + $0xc] sm:$0xf]
    %v152 = vld [vmem:[#allocation6 + $0x10] sm:$0xf]
    %v153 = vld [vmem:[#allocation6 + $0x14] sm:$0xf]
    %v154 = vld [vmem:[#allocation6 + $0x18] sm:$0xf]
    %v155 = vld [vmem:[#allocation6 + $0x1c] sm:$0xf]
    %v156 = vld [vmem:[#allocation6 + $0x20] sm:$0xf]
    %v157 = vld [vmem:[#allocation6 + $0x24] sm:$0xf]
    %v158 = vld [vmem:[#allocation6 + $0x28] sm:$0xf]
    %v159 = vld [vmem:[#allocation6 + $0x2c] sm:$0xf]
    %v160 = vld [vmem:[#allocation6 + $0x30] sm:$0xf]
    %v161 = vld [vmem:[#allocation6 + $0x34] sm:$0xf]
    %v162 = vld [vmem:[#allocation6 + $0x38] sm:$0xf]
    %v163 = vld [vmem:[#allocation6 + $0x3c] sm:$0xf]
    %v180 = vunpack.c.l.b16 %v148
    %v181 = vunpack.c.l.b16 %v149
    %v182 = vunpack.c.l.b16 %v150
    %v183 = vunpack.c.l.b16 %v151
    %v184 = vunpack.c.l.b16 %v152
    %v185 = vunpack.c.l.b16 %v153
    %v186 = vunpack.c.l.b16 %v154
    %v187 = vunpack.c.l.b16 %v155
    %v188 = vunpack.c.l.b16 %v156
    %v189 = vunpack.c.l.b16 %v157
    %v190 = vunpack.c.l.b16 %v158
    %v191 = vunpack.c.l.b16 %v159
    %v192 = vunpack.c.l.b16 %v160
    %v193 = vunpack.c.l.b16 %v161
    %v194 = vunpack.c.l.b16 %v162
    %v195 = vunpack.c.l.b16 %v163
    %v196 = vpack.c.b16 %v181, %v180
    %v197 = vpack.c.b16 %v183, %v182
    %v198 = vpack.c.b16 %v185, %v184
    %v199 = vpack.c.b16 %v187, %v186
    %v200 = vpack.c.b16 %v189, %v188
    %v201 = vpack.c.b16 %v191, %v190
    %v202 = vpack.c.b16 %v193, %v192
    %v203 = vpack.c.b16 %v195, %v194
    %212 = vmatprep.subr.bf16.mxu0 0
    %213 = vmatpush1.bf16.msra.mxu0 %v196
    %214 = vmatprep.subr.bf16.mxu0 0
    %215 = vmatpush1.bf16.msra.mxu0 %v197
    %216 = vmatprep.subr.bf16.mxu0 0
    %217 = vmatpush1.bf16.msra.mxu0 %v198
    %218 = vmatprep.subr.bf16.mxu0 0
    %219 = vmatpush1.bf16.msra.mxu0 %v199
    %220 = vmatprep.subr.bf16.mxu0 0
    %221 = vmatpush1.bf16.msra.mxu0 %v200
    %222 = vmatprep.subr.bf16.mxu0 0
    %223 = vmatpush1.bf16.msra.mxu0 %v201
    %224 = vmatprep.subr.bf16.mxu0 0
    %225 = vmatpush1.bf16.msra.mxu0 %v202
    %226 = vmatprep.subr.bf16.mxu0 0
    %227 = vmatpush1.bf16.msra.mxu0 %v203
    %228 = vmatprep.subr.bf16.mxu0 0
    %229 = vmatpush1.bf16.msra.mxu0 0
    %230 = vmatprep.subr.bf16.mxu0 0
    %231 = vmatpush1.bf16.msra.mxu0 0
    %232 = vmatprep.subr.bf16.mxu0 0
    %233 = vmatpush1.bf16.msra.mxu0 0
    %234 = vmatprep.subr.bf16.mxu0 0
    %235 = vmatpush1.bf16.msra.mxu0 0
    %236 = vmatprep.subr.bf16.mxu0 0
    %237 = vmatpush1.bf16.msra.mxu0 0
    %238 = vmatprep.subr.bf16.mxu0 0
    %239 = vmatpush1.bf16.msra.mxu0 0
    %240 = vmatprep.subr.bf16.mxu0 0
    %241 = vmatpush1.bf16.msra.mxu0 0
    %242 = vmatprep.subr.bf16.mxu0 0
    %243 = vmatpush1.bf16.msra.mxu0 0
    %244 = vmatprep.mubr.bf16.mxu0 0
    %245 = vmatmul.mubr.bf16.gmra.mrb[0].mxu0 %v147
    %v246 = vpop.f32.mrb[0].mxu0
    %v247 = vadd.f32 0.0, %v246
    %v248 = vpop.f32.mrb[0].mxu0
    %v249 = vpop.f32.mrb[0].mxu0
    %v250 = vpop.f32.mrb[0].mxu0
    %251 = vdwg.mxu0
    %v252 = vmax.f32 %v247, 0.0
    %v253 = vpack.c.bf16 %v252, %v252
    %s254 = scalar_lea.vmem [#allocation6], 64
    %v255 = vld [vmem:[%s254] sm:$0xf]
    %v256 = vld [vmem:[%s254 + $0x4] sm:$0xf]
    %v257 = vld [vmem:[%s254 + $0x8] sm:$0xf]
    %v258 = vld [vmem:[%s254 + $0xc] sm:$0xf]
    %v259 = vld [vmem:[%s254 + $0x10] sm:$0xf]
    %v260 = vld [vmem:[%s254 + $0x14] sm:$0xf]
    %v261 = vld [vmem:[%s254 + $0x18] sm:$0xf]
    %v262 = vld [vmem:[%s254 + $0x1c] sm:$0xf]
    %v263 = vld [vmem:[%s254 + $0x20] sm:$0xf]
    %v264 = vld [vmem:[%s254 + $0x24] sm:$0xf]
    %v265 = vld [vmem:[%s254 + $0x28] sm:$0xf]
    %v266 = vld [vmem:[%s254 + $0x2c] sm:$0xf]
    %v267 = vld [vmem:[%s254 + $0x30] sm:$0xf]
    %v268 = vld [vmem:[%s254 + $0x34] sm:$0xf]
    %v269 = vld [vmem:[%s254 + $0x38] sm:$0xf]
    %v270 = vld [vmem:[%s254 + $0x3c] sm:$0xf]
    %v287 = vunpack.c.l.b16 %v255
    %v288 = vunpack.c.l.b16 %v256
    %v289 = vunpack.c.l.b16 %v257
    %v290 = vunpack.c.l.b16 %v258
    %v291 = vunpack.c.l.b16 %v259
    %v292 = vunpack.c.l.b16 %v260
    %v293 = vunpack.c.l.b16 %v261
    %v294 = vunpack.c.l.b16 %v262
    %v295 = vunpack.c.l.b16 %v263
    %v296 = vunpack.c.l.b16 %v264
    %v297 = vunpack.c.l.b16 %v265
    %v298 = vunpack.c.l.b16 %v266
    %v299 = vunpack.c.l.b16 %v267
    %v300 = vunpack.c.l.b16 %v268
    %v301 = vunpack.c.l.b16 %v269
    %v302 = vunpack.c.l.b16 %v270
    %v303 = vpack.c.b16 %v288, %v287
    %v304 = vpack.c.b16 %v290, %v289
    %v305 = vpack.c.b16 %v292, %v291
    %v306 = vpack.c.b16 %v294, %v293
    %v307 = vpack.c.b16 %v296, %v295
    %v308 = vpack.c.b16 %v298, %v297
    %v309 = vpack.c.b16 %v300, %v299
    %v310 = vpack.c.b16 %v302, %v301
    %319 = vmatprep.subr.bf16.mxu0 0
    %320 = vmatpush1.bf16.msra.mxu0 %v303
    %321 = vmatprep.subr.bf16.mxu0 0
    %322 = vmatpush1.bf16.msra.mxu0 %v304
    %323 = vmatprep.subr.bf16.mxu0 0
    %324 = vmatpush1.bf16.msra.mxu0 %v305
    %325 = vmatprep.subr.bf16.mxu0 0
    %326 = vmatpush1.bf16.msra.mxu0 %v306
    %327 = vmatprep.subr.bf16.mxu0 0
    %328 = vmatpush1.bf16.msra.mxu0 %v307
    %329 = vmatprep.subr.bf16.mxu0 0
    %330 = vmatpush1.bf16.msra.mxu0 %v308
    %331 = vmatprep.subr.bf16.mxu0 0
    %332 = vmatpush1.bf16.msra.mxu0 %v309
    %333 = vmatprep.subr.bf16.mxu0 0
    %334 = vmatpush1.bf16.msra.mxu0 %v310
    %335 = vmatprep.subr.bf16.mxu0 0
    %336 = vmatpush1.bf16.msra.mxu0 0
    %337 = vmatprep.subr.bf16.mxu0 0
    %338 = vmatpush1.bf16.msra.mxu0 0
    %339 = vmatprep.subr.bf16.mxu0 0
    %340 = vmatpush1.bf16.msra.mxu0 0
    %341 = vmatprep.subr.bf16.mxu0 0
    %342 = vmatpush1.bf16.msra.mxu0 0
    %343 = vmatprep.subr.bf16.mxu0 0
    %344 = vmatpush1.bf16.msra.mxu0 0
    %345 = vmatprep.subr.bf16.mxu0 0
    %346 = vmatpush1.bf16.msra.mxu0 0
    %347 = vmatprep.subr.bf16.mxu0 0
    %348 = vmatpush1.bf16.msra.mxu0 0
    %349 = vmatprep.subr.bf16.mxu0 0
    %350 = vmatpush1.bf16.msra.mxu0 0
    %351 = vmatprep.mubr.bf16.mxu0 0
    %352 = vmatmul.mubr.bf16.gmra.mrb[0].mxu0 %v253
    %v353 = vpop.f32.mrb[0].mxu0
    %v354 = vadd.f32 0.0, %v353
    %v355 = vpop.f32.mrb[0].mxu0
    %v356 = vpop.f32.mrb[0].mxu0
    %v357 = vpop.f32.mrb[0].mxu0
    %358 = vdwg.mxu0
    %v359 = vlaneseq
    %v360 = vand.u32 %v359, 127
    %vm361 = vcmp.ge.s32.totalorder %v360, 1
    %vm362 = vcmp.le.s32.totalorder %v360, 4
    %vm363 = vmand %vm361, %vm362
    %v364 = vsel %vm363, %v354, -1e+30
    %365 = vmax.xlane.f32.xlu0 %v364
    %v366 = vpop.xlane.xlu0 %365
    %v367 = vsub.f32 %v364, %v366
    %v368 = vmul.f32 %v367, 1.442695
    %v369 = vpow.pop %v368
    %370 = vadd.xlane.f32.xlu0 %v369
    %v371 = vpop.xlane.xlu0 %370
    %v372 = vrcp.pop %v371
    %v373 = vmul.f32 %v369, %v372
    %vm374 = vcmp.eq.s32.totalorder %v360, 0
    %v375 = vsel %vm374, %v354, %v373
    %376 = vst [vmem:[%s4] sm:$0xff] %v375
    // Predicated region
    $region30: #{ac_linear_forward.1} parent=1 // pred_check
      _
    $region31: #{ac_linear_forward.1} parent=1 // pred_check_branch
      %378 = sbr.rel (0) target = $region33
    $region32: #{ac_linear_forward.1} parent=1 // pred_region
      _
    $region33: #{ac_linear_forward.1} parent=1 // pred_fallthru
      _
    // Predicated region
    $region34: #{ac_linear_forward.1} parent=1 // pred_check
      _
    $region35: #{ac_linear_forward.1} parent=1 // pred_check_branch
      %380 = sbr.rel (0) target = $region37
    $region36: #{ac_linear_forward.1} parent=1 // pred_region
      _
    $region37: #{ac_linear_forward.1} parent=1 // pred_fallthru
      _
    %381 = vsyncpa [#allocation3], 1
    %382 = vsyncpa [#allocation5], 1

</llo_original>
